<compile_context>
chip_gen: v6e
topology: v6e:2x2x1
jax: 0.10.0
libtpu: 0.0.40
codegen_flags: <defaults>
</compile_context>

<pallas_src>
import jax
import jax.numpy as jnp
from jax.experimental import pallas as pl
from jax.experimental.pallas import tpu as pltpu


def _round_up(a, b):
    return ((a + b - 1) // b) * b


def _make_cage_kernel(B, TB, D, Dp, K, obj_v, task_v, lmbda):
    inv_b = 1.0 / float(B)                    # mean(softplus)      -> sum * (1/B)
    reg_coef = float(lmbda) / float(B * D)    # lmbda * sum-of-means -> sum_sq * coef
    task_off = int(obj_v)
    grasp_off = int(obj_v + task_v)

    def kernel(x_ref, y_ref, w_ref, out_ref, acc_ref):
        c = pl.program_id(0)            # core-split axis ("parallel")
        i = pl.program_id(1)            # batch-tile axis ("arbitrary", carries acc)
        nt = pl.num_programs(1)

        @pl.when(i == 0)
        def _init():
            acc_ref[...] = jnp.zeros((1, TB), jnp.float32)

        # ---- fused embedding lookup: 3-hot selector x block-diag table on the MXU ----
        obj_idx = x_ref[0:1, :]                         # (1, TB) int32, batch on lanes
        task_idx = x_ref[1:2, :] + task_off
        grasp_idx = x_ref[2:3, :] + grasp_off
        viota = jax.lax.broadcasted_iota(jnp.int32, (K, TB), 0)
        onehot = ((viota == obj_idx) | (viota == task_idx) | (viota == grasp_idx)
                  ).astype(jnp.float32)                 # (K, TB), exactly 3 ones/column
        # W is block-diagonal (obj.T | task.T | grasp.T stacked on sublanes), so one
        # matmul gathers h, r, t at once: (3*Dp, K) @ (K, TB) -> (3*Dp, TB).
        hrt = jnp.dot(w_ref[...], onehot, preferred_element_type=jnp.float32)

        h = hrt[0:Dp, :]
        r = hrt[Dp:2 * Dp, :]
        t = hrt[2 * Dp:3 * Dp, :]

        # ---- score + stable softplus on lane-dense (1, TB) rows ----------------------
        score = -jnp.sum(h * r * t, axis=0, keepdims=True)            # (1, TB)
        z = score * y_ref[...]                                         # (1, TB)
        sp = jnp.maximum(z, 0.0) + jnp.log1p(jnp.exp(-jnp.abs(z)))     # softplus(z)

        # ---- regularizer: single fused sum of squares over all three embeddings ------
        sq = jnp.sum(hrt * hrt, axis=0, keepdims=True)                 # (1, TB)

        # Mask padded rows of this (possibly padded) batch tile.
        row = (c * nt + i) * TB + jax.lax.broadcasted_iota(jnp.int32, (1, TB), 1)
        contrib = jnp.where(row < B, sp * inv_b + sq * reg_coef, 0.0)

        acc_ref[...] += contrib                 # element-wise, vreg-wide accumulate

        @pl.when(i == nt - 1)
        def _finalize():
            partial = jnp.sum(acc_ref[...])     # single cross-lane reduce per core
            out_ref[...] = jnp.zeros((8, 128), jnp.float32) + partial

    return kernel


def cage_forward(obj_emb, task_emb, grasp_emb, x, y, lmbda=0.0,
                 tb_max=4096, num_cores=2):
    """Fused CAGEModel.forward: x (B,3) int32 indices, y (B,) labels -> scalar loss."""
    obj_v, D = obj_emb.shape
    task_v, _ = task_emb.shape
    grasp_v, _ = grasp_emb.shape
    B = x.shape[0]

    Dp = _round_up(D, 8)                       # sublane-aligned per-table row span
    total_v = obj_v + task_v + grasp_v
    K = _round_up(max(total_v, 128), 128)      # one-hot contraction width (MXU K dim)

    # Batch tile: batch lives on the 128-lane axis, so TB is always a multiple of 128.
    TB = min(int(tb_max), _round_up(max(1, -(-B // num_cores)), 128))
    TB = _round_up(TB, 128)
    tiles_per_core = -(-B // (num_cores * TB))
    B_pad = num_cores * tiles_per_core * TB

    # Lane-dense (batch-in-lanes) inputs; zero-padded tail rows are masked in-kernel.
    x_t = jnp.pad(jnp.asarray(x, jnp.int32).T, ((0, 0), (0, B_pad - B)))
    y_t = jnp.pad(jnp.asarray(y, jnp.float32).reshape(1, -1), ((0, 0), (0, B_pad - B)))

    # Block-diagonal packed table (3*Dp, K): one MXU matmul gathers h, r, t at once.
    W = jnp.zeros((3 * Dp, K), jnp.float32)
    W = W.at[0:D, 0:obj_v].set(jnp.asarray(obj_emb, jnp.float32).T)
    W = W.at[Dp:Dp + D, obj_v:obj_v + task_v].set(jnp.asarray(task_emb, jnp.float32).T)
    W = W.at[2 * Dp:2 * Dp + D, obj_v + task_v:total_v].set(
        jnp.asarray(grasp_emb, jnp.float32).T)

    kernel = _make_cage_kernel(B, TB, D, Dp, K, obj_v, task_v, float(lmbda))

    tile_map = lambda c, i: (0, c * tiles_per_core + i)
    out = pl.pallas_call(
        kernel,
        out_shape=jax.ShapeDtypeStruct((num_cores * 8, 128), jnp.float32),
        grid=(num_cores, tiles_per_core),
        in_specs=[
            pl.BlockSpec((3, TB), tile_map),                  # x indices, batch on lanes
            pl.BlockSpec((1, TB), tile_map),                  # labels y, batch on lanes
            pl.BlockSpec((3 * Dp, K), lambda c, i: (0, 0)),   # packed tables: VMEM-resident
        ],
        out_specs=pl.BlockSpec((8, 128), lambda c, i: (c, 0)),    # per-core partial block
        scratch_shapes=[pltpu.VMEM((1, TB), jnp.float32)],        # vreg-wide running sum
        compiler_params=pltpu.CompilerParams(
            dimension_semantics=("parallel", "arbitrary"),        # cores | batch tiles
            vmem_limit_bytes=48 * 1024 * 1024,
        ),
    )(x_t, y_t, W)

    # Each core broadcast its scalar partial across its (8,128) block; pick one per core.
    return jnp.sum(out.reshape(num_cores, 8, 128)[:, 0, 0])


def xavier_uniform(key, shape):
    fan_in, fan_out = shape
    bound = (6.0 / (fan_in + fan_out)) ** 0.5
    return jax.random.uniform(key, shape, jnp.float32, -bound, bound)


def reference_forward(obj_emb, task_emb, grasp_emb, x, y, lmbda):
    h = obj_emb[x[:, 0]]
    r = task_emb[x[:, 1]]
    t = grasp_emb[x[:, 2]]
    score = -jnp.sum(h * t * r, -1)
    regul = jnp.mean(h ** 2) + jnp.mean(t ** 2) + jnp.mean(r ** 2)
    return jnp.mean(jax.nn.softplus(score * y)) + lmbda * regul


if __name__ == "__main__":
    key = jax.random.PRNGKey(0)
    k1, k2, k3, k4, k5 = jax.random.split(key, 5)

    object_vocab_size = 12
    task_vocab_size = 6
    grasp_vocab_size = 10
    embedding_dim = 32
    batch = 8
    lmbda = 0.01

    # Deterministic parameter init (xavier_uniform, like the module's init_weights)
    obj_emb = xavier_uniform(k1, (object_vocab_size, embedding_dim))
    task_emb = xavier_uniform(k2, (task_vocab_size, embedding_dim))
    grasp_emb = xavier_uniform(k3, (grasp_vocab_size, embedding_dim))

    # x: (B, 3) indices [object, task, grasp]; y: (B,) labels in {-1, +1}
    x = jnp.stack(
        [
            jax.random.randint(k4, (batch,), 0, object_vocab_size),
            jax.random.randint(jax.random.fold_in(k4, 1), (batch,), 0, task_vocab_size),
            jax.random.randint(jax.random.fold_in(k4, 2), (batch,), 0, grasp_vocab_size),
        ],
        axis=1,
    ).astype(jnp.int32)
    y = 2.0 * jax.random.bernoulli(k5, 0.5, (batch,)).astype(jnp.float32) - 1.0

    loss = cage_forward(obj_emb, task_emb, grasp_emb, x, y, lmbda=lmbda)
    loss = jax.block_until_ready(loss)

    ref = reference_forward(obj_emb, task_emb, grasp_emb, x, y, lmbda)
    assert jnp.allclose(loss, ref, rtol=1e-5, atol=1e-5), (loss, ref)

    print("KERNEL_OK")
</pallas_src>

<mosaic_0001>
module attributes {stable_mosaic.version = 11 : i64} {
  func.func @kernel(%arg0: i32, %arg1: i32, %arg2: memref<3x128xi32, #tpu.memory_space<vmem>>, %arg3: memref<1x128xf32, #tpu.memory_space<vmem>>, %arg4: memref<96x128xf32, #tpu.memory_space<vmem>>, %arg5: memref<8x128xf32, #tpu.memory_space<vmem>>, %arg6: memref<1x128xf32, #tpu.memory_space<vmem>>) attributes {dimension_semantics = [#tpu.dimension_semantics<parallel>, #tpu.dimension_semantics<arbitrary>], iteration_bounds = array<i64: 2, 1>, scalar_prefetch = 0 : i64, scratch_operands = 1 : i64, tpu.core_type = #tpu.core_type<tc>, window_params = [{transform_indices = @transform_0, window_bounds = array<i64: 3, 128>}, {transform_indices = @transform_1, window_bounds = array<i64: 1, 128>}, {pipeline_mode = #tpu.pipeline_mode<synchronous>, transform_indices = @transform_2, window_bounds = array<i64: 96, 128>}, {transform_indices = @transform_3, window_bounds = array<i64: 8, 128>}]} {
    %c0_i32 = arith.constant 0 : i32
    %0 = arith.cmpi eq, %arg1, %c0_i32 : i32
    %1 = arith.extui %0 : i1 to i32
    %c0_i32_0 = arith.constant 0 : i32
    %2 = arith.cmpi ne, %1, %c0_i32_0 : i32
    scf.if %2 {
      %cst_22 = arith.constant 0.000000e+00 : f32
      %66 = vector.broadcast %cst_22 : f32 to vector<1x128xf32>
      %c0_23 = arith.constant 0 : index
      %c0_24 = arith.constant 0 : index
      %67 = vector.load %arg6[%c0_23, %c0_24] : memref<1x128xf32, #tpu.memory_space<vmem>>, vector<1x128xf32>
      tpu.vector_store %arg6[%c0_23, %c0_24], %66 {strides = array<i32>} : memref<1x128xf32, #tpu.memory_space<vmem>>, vector<1x128xf32>,
    } else {
    }
    %c0 = arith.constant 0 : index
    %c0_1 = arith.constant 0 : index
    %3 = vector.load %arg2[%c0, %c0_1] : memref<3x128xi32, #tpu.memory_space<vmem>>, vector<1x128xi32>
    %c1 = arith.constant 1 : index
    %c0_2 = arith.constant 0 : index
    %4 = vector.load %arg2[%c1, %c0_2] : memref<3x128xi32, #tpu.memory_space<vmem>>, vector<1x128xi32>
    %c12_i32 = arith.constant 12 : i32
    %5 = vector.broadcast %c12_i32 : i32 to vector<1x128xi32>
    %6 = arith.addi %4, %5 : vector<1x128xi32>
    %c2 = arith.constant 2 : index
    %c0_3 = arith.constant 0 : index
    %7 = vector.load %arg2[%c2, %c0_3] : memref<3x128xi32, #tpu.memory_space<vmem>>, vector<1x128xi32>
    %c18_i32 = arith.constant 18 : i32
    %8 = vector.broadcast %c18_i32 : i32 to vector<1x128xi32>
    %9 = arith.addi %7, %8 : vector<1x128xi32>
    %10 = tpu.iota {dimensions = array<i32: 0>} : vector<128x128xi32>
    %11 = vector.broadcast %3 : vector<1x128xi32> to vector<128x128xi32>
    %12 = arith.cmpi eq, %10, %11 : vector<128x128xi32>
    %13 = vector.broadcast %6 : vector<1x128xi32> to vector<128x128xi32>
    %14 = arith.cmpi eq, %10, %13 : vector<128x128xi32>
    %15 = arith.ori %12, %14 : vector<128x128xi1>
    %16 = vector.broadcast %9 : vector<1x128xi32> to vector<128x128xi32>
    %17 = arith.cmpi eq, %10, %16 : vector<128x128xi32>
    %18 = arith.ori %15, %17 : vector<128x128xi1>
    %19 = arith.extui %18 : vector<128x128xi1> to vector<128x128xi32>
    %20 = arith.sitofp %19 : vector<128x128xi32> to vector<128x128xf32>
    %c0_4 = arith.constant 0 : index
    %c0_5 = arith.constant 0 : index
    %21 = vector.load %arg4[%c0_4, %c0_5] : memref<96x128xf32, #tpu.memory_space<vmem>>, vector<96x128xf32>
    %cst = arith.constant dense<0.000000e+00> : vector<96x128xf32>
    %22 = tpu.matmul %21, %20, %cst {dimension_numbers = #tpu.dot_dimension_numbers<[1], [0], [0], [1], [0, 0, 1, 1], [], []>} : vector<96x128xf32>, vector<128x128xf32>, vector<96x128xf32> -> vector<96x128xf32>
    %23 = vector.extract_strided_slice %22 {offsets = [0, 0], sizes = [32, 128], strides = [1, 1]} : vector<96x128xf32> to vector<32x128xf32>
    %24 = vector.extract_strided_slice %22 {offsets = [32, 0], sizes = [32, 128], strides = [1, 1]} : vector<96x128xf32> to vector<32x128xf32>
    %25 = vector.extract_strided_slice %22 {offsets = [64, 0], sizes = [32, 128], strides = [1, 1]} : vector<96x128xf32> to vector<32x128xf32>
    %26 = arith.mulf %23, %24 : vector<32x128xf32>
    %27 = arith.mulf %26, %25 : vector<32x128xf32>
    %cst_6 = arith.constant dense<0.000000e+00> : vector<128xf32>
    %28 = vector.multi_reduction <add>, %27, %cst_6 [0] : vector<32x128xf32> to vector<128xf32>
    %29 = vector.shape_cast %28 : vector<128xf32> to vector<1x128xf32>
    %cst_7 = arith.constant 0.000000e+00 : f32
    %30 = vector.broadcast %cst_7 : f32 to vector<1x128xf32>
    %31 = arith.subf %30, %29 : vector<1x128xf32>
    %c0_8 = arith.constant 0 : index
    %c0_9 = arith.constant 0 : index
    %32 = vector.load %arg3[%c0_8, %c0_9] : memref<1x128xf32, #tpu.memory_space<vmem>>, vector<1x128xf32>
    %33 = arith.mulf %31, %32 : vector<1x128xf32>
    %cst_10 = arith.constant 0.000000e+00 : f32
    %34 = vector.broadcast %cst_10 : f32 to vector<1x128xf32>
    %35 = arith.maximumf %33, %34 : vector<1x128xf32>
    %36 = math.absf %33 : vector<1x128xf32>
    %cst_11 = arith.constant 0.000000e+00 : f32
    %37 = vector.broadcast %cst_11 : f32 to vector<1x128xf32>
    %38 = arith.subf %37, %36 : vector<1x128xf32>
    %39 = math.exp %38 : vector<1x128xf32>
    %40 = math.log1p %39 : vector<1x128xf32>
    %41 = arith.addf %35, %40 : vector<1x128xf32>
    %42 = arith.mulf %22, %22 : vector<96x128xf32>
    %cst_12 = arith.constant dense<0.000000e+00> : vector<128xf32>
    %43 = vector.multi_reduction <add>, %42, %cst_12 [0] : vector<96x128xf32> to vector<128xf32>
    %44 = vector.shape_cast %43 : vector<128xf32> to vector<1x128xf32>
    %c1_i32 = arith.constant 1 : i32
    %45 = arith.muli %arg0, %c1_i32 : i32
    %46 = arith.addi %45, %arg1 : i32
    %c128_i32 = arith.constant 128 : i32
    %47 = arith.muli %46, %c128_i32 : i32
    %48 = tpu.iota {dimensions = array<i32: 1>} : vector<1x128xi32>
    %49 = vector.broadcast %47 : i32 to vector<1x128xi32>
    %50 = arith.addi %49, %48 : vector<1x128xi32>
    %c8_i32 = arith.constant 8 : i32
    %51 = vector.broadcast %c8_i32 : i32 to vector<1x128xi32>
    %52 = arith.cmpi slt, %50, %51 : vector<1x128xi32>
    %cst_13 = arith.constant 1.250000e-01 : f32
    %53 = vector.broadcast %cst_13 : f32 to vector<1x128xf32>
    %54 = arith.mulf %41, %53 : vector<1x128xf32>
    %cst_14 = arith.constant 3.906250e-05 : f32
    %55 = vector.broadcast %cst_14 : f32 to vector<1x128xf32>
    %56 = arith.mulf %44, %55 : vector<1x128xf32>
    %57 = arith.addf %54, %56 : vector<1x128xf32>
    %cst_15 = arith.constant 0.000000e+00 : f32
    %58 = vector.broadcast %cst_15 : f32 to vector<1x128xf32>
    %59 = arith.select %52, %57, %58 : vector<1x128xi1>, vector<1x128xf32>
    %c0_16 = arith.constant 0 : index
    %c0_17 = arith.constant 0 : index
    %60 = vector.load %arg6[%c0_16, %c0_17] : memref<1x128xf32, #tpu.memory_space<vmem>>, vector<1x128xf32>
    %61 = arith.addf %60, %59 : vector<1x128xf32>
    %c0_18 = arith.constant 0 : index
    %c0_19 = arith.constant 0 : index
    %62 = vector.load %arg6[%c0_18, %c0_19] : memref<1x128xf32, #tpu.memory_space<vmem>>, vector<1x128xf32>
    tpu.vector_store %arg6[%c0_18, %c0_19], %61 {strides = array<i32>} : memref<1x128xf32, #tpu.memory_space<vmem>>, vector<1x128xf32>,
    %c0_i32_20 = arith.constant 0 : i32
    %63 = arith.cmpi eq, %arg1, %c0_i32_20 : i32
    %64 = arith.extui %63 : i1 to i32
    %c0_i32_21 = arith.constant 0 : i32
    %65 = arith.cmpi ne, %64, %c0_i32_21 : i32
    scf.if %65 {
      %c0_22 = arith.constant 0 : index
      %c0_23 = arith.constant 0 : index
      %66 = vector.load %arg6[%c0_22, %c0_23] : memref<1x128xf32, #tpu.memory_space<vmem>>, vector<1x128xf32>
      %67 = vector.shape_cast %66 : vector<1x128xf32> to vector<1x1x128xf32>
      %cst_24 = arith.constant dense<0.000000e+00> : vector<1xf32>
      %68 = vector.multi_reduction <add>, %67, %cst_24 [1, 2] : vector<1x1x128xf32> to vector<1xf32>
      %69 = vector.shape_cast %68 : vector<1xf32> to vector<1x1x1xf32>
      %70 = vector.extract %69[0, 0, 0] : f32 from vector<1x1x1xf32>
      %cst_25 = arith.constant 0.000000e+00 : f32
      %71 = vector.broadcast %cst_25 : f32 to vector<8x128xf32>
      %72 = vector.broadcast %70 : f32 to vector<8x128xf32>
      %73 = arith.addf %71, %72 : vector<8x128xf32>
      %c0_26 = arith.constant 0 : index
      %c0_27 = arith.constant 0 : index
      %74 = vector.load %arg5[%c0_26, %c0_27] : memref<8x128xf32, #tpu.memory_space<vmem>>, vector<8x128xf32>
      tpu.vector_store %arg5[%c0_26, %c0_27], %73 {strides = array<i32>} : memref<8x128xf32, #tpu.memory_space<vmem>>, vector<8x128xf32>,
    } else {
    }
    return
  }
  func.func @transform_0(%arg0: i32, %arg1: i32) -> (i32, i32) {
    %c1_i32 = arith.constant 1 : i32
    %0 = arith.muli %arg0, %c1_i32 : i32
    %1 = arith.addi %0, %arg1 : i32
    %c0_i32 = arith.constant 0 : i32
    %c0_i32_0 = arith.constant 0 : i32
    return %c0_i32, %1 : i32, i32
  }
  func.func @transform_1(%arg0: i32, %arg1: i32) -> (i32, i32) {
    %c1_i32 = arith.constant 1 : i32
    %0 = arith.muli %arg0, %c1_i32 : i32
    %1 = arith.addi %0, %arg1 : i32
    %c0_i32 = arith.constant 0 : i32
    %c0_i32_0 = arith.constant 0 : i32
    return %c0_i32, %1 : i32, i32
  }
  func.func @transform_2(%arg0: i32, %arg1: i32) -> (i32, i32) {
    %c0_i32 = arith.constant 0 : i32
    %c0_i32_0 = arith.constant 0 : i32
    %c0_i32_1 = arith.constant 0 : i32
    return %c0_i32, %c0_i32_0 : i32, i32
  }
  func.func @transform_3(%arg0: i32, %arg1: i32) -> (i32, i32) {
    %c0_i32 = arith.constant 0 : i32
    %c0_i32_0 = arith.constant 0 : i32
    return %arg0, %c0_i32 : i32, i32
  }
}

</mosaic_0001>

<llo_original>
// kernel: tpu_custom_call.1
$region0: #{tpu_custom_call.1}
  #allocation0 [shape = 'u32[]', space=smem, size = 0x4, offset = 0x4, fixed_abs, tag = 'smem constant byte address 0x4 - core index']
  #allocation1 [shape = 'u32[144,128]{1,0:T(1,128)}', space=vmem, size = 0x12000, scoped, tag = 'internal scratch']
  #allocation2 [shape = 'f32[1,128]{1,0:T(1,128)}', space=vmem, size = 0x200, scoped, tag = 'scratch operand']
  %s0 = inlined_call_operand.hbm [shape: s32[3,256], index: 0, kind: input, shape index: {}]
  %s1 = inlined_call_operand.hbm [shape: f32[1,256], index: 1, kind: input, shape index: {}]
  %s2 = inlined_call_operand.hbm [shape: f32[96,128], index: 2, kind: input, shape index: {}]
  %s3 = inlined_call_operand.hbm [shape: f32[16,128], index: 3, kind: output, shape index: {}]
  %s4 = sld [smem:[#allocation0]]
  $region65: #{tpu_custom_call.1} parent=0
    _
  %s6 = ssub.s32 1, %s4
  %s7 = scalar_select 0, %s6, %s4
  $region1: #{tpu_custom_call.1} parent=0
    #allocation3 [shape = 'u8[4096]{0}', space=vmem, size = 0x1000, scoped, tag = 'input window, operand 0']
    #allocation4 [shape = 's32[2]{0}', space=sflag, size = 0x8, scoped, tag = 'scoped memory for tpu_custom_call.1']
    #allocation5 [shape = 's32[2]{0}', space=sflag, size = 0x8, scoped, tag = 'scoped memory for tpu_custom_call.1']
    #allocation6 [shape = 'u8[1024]{0}', space=vmem, size = 0x400, scoped, tag = 'input window, operand 1']
    #allocation7 [shape = 's32[2]{0}', space=sflag, size = 0x8, scoped, tag = 'scoped memory for tpu_custom_call.1']
    #allocation8 [shape = 'u8[49152]{0}', space=vmem, size = 0xc000, scoped, tag = 'input window, operand 2, single buffered']
    #allocation9 [shape = 'u8[8192]{0}', space=vmem, size = 0x2000, scoped, tag = 'output window, operand 0']
    %8 = vsyncpa [#allocation4], 0
    %s9 = scalar_lea.sflag [#allocation4], 1
    %10 = vsyncpa %s9, 0
    %11 = vsyncpa [#allocation7], 0
    %s12 = scalar_lea.sflag [#allocation7], 1
    %13 = vsyncpa %s12, 0
    %14 = vsyncpa [#allocation5], 0
    %s15 = scalar_lea.sflag [#allocation5], 1
    %16 = vsyncpa %s15, 0
    loop: start=0, step=1, limit=4
    $region2: #{tpu_custom_call.1} parent=1 // loop_pre_header
      _
    $region3: #{tpu_custom_call.1} parent=1 // loop_header
      %s18 = sphi 0, %s22
      %p19 = scmp.ge.s32.totalorder %s18, 4
      %s25 = sphi 0, %s37
      %s26 = sphi 0, %s33
      %s27 = sphi 0, %s25
      %s28 = sphi 0, %s26
      %s29 = sphi 0, %s27
      %s30 = sphi 0, %s28
      %s42 = sphi 0, %s44
      %s45 = sphi 0, %s42
      %s46 = sphi 0, %s45
      %s62 = sphi 0, %s46
      %s70 = sphi 0, %s72
      %s73 = sphi 0, %s70
      %s74 = sphi 0, %s73
      %s90 = sphi 0, %s74
      %s94 = sphi 0, %s94
      %s96 = sphi 0, %s94
      %s97 = sphi 0, %s96
      %s111 = sphi 0, %s97
      %s117 = sphi 0, %s119
      %s120 = sphi 0, %s117
      %s121 = sphi 0, %s120
      %s137 = sphi 0, %s121
    $region4: #{tpu_custom_call.1} parent=1 // loop_header_branch
      %21 = sbr.rel (%p19) target = $region8
    $region5: #{tpu_custom_call.1} parent=1 // loop_body
      %s23 = ssub.s32 %s18, 1
      %s24 = ssub.s32 %s18, 2
      %s31 = sadd.s32 1, %s26
      %p32 = scmp.ge.s32.totalorder %s31, 1
      %s33 = scalar_select %p32, 0, %s31
      %s34 = sadd.s32 1, %s25
      %s35 = scalar_select %p32, %s34, %s25
      %p36 = scmp.ge.s32.totalorder %s35, 2
      %s37 = scalar_select %p36, 0, %s35
      %s38 = sadd.s32 %s25, %s26
      %s39 = sadd.s32 %s37, %s33
      %s40 = ssub.s32 %s38, %s39
      %p41 = scmp.eq.s32.totalorder %s40, 0
      %s43 = sadd.s32 %s42, 1
      %s44 = scalar_select %p41, %s42, %s43
      %p47 = pneg %p41
      %p48 = scmp.eq.s32.totalorder %s18, 1
      %p49 = por %p47, %p48
      %p50 = scmp.ne.s32.totalorder %s42, %s45
      %p51 = scmp.eq.s32.totalorder %s18, 0
      %p52 = por %p50, %p51
      %p53 = scmp.ne.s32.totalorder %s42, %s45
      %p54 = scmp.eq.s32.totalorder %s23, 1
      %p55 = por %p53, %p54
      %p56 = scmp.ne.s32.totalorder %s45, %s46
      %p57 = scmp.eq.s32.totalorder %s23, 0
      %p58 = por %p56, %p57
      %p59 = scmp.ne.s32.totalorder %s45, %s46
      %p60 = scmp.eq.s32.totalorder %s24, 1
      %p61 = por %p59, %p60
      %p63 = scmp.ne.s32.totalorder %s46, %s62
      %p64 = scmp.eq.s32.totalorder %s24, 0
      %p65 = por %p63, %p64
      %s66 = sadd.s32 %s25, %s26
      %s67 = sadd.s32 %s37, %s33
      %s68 = ssub.s32 %s66, %s67
      %p69 = scmp.eq.s32.totalorder %s68, 0
      %s71 = sadd.s32 %s70, 1
      %s72 = scalar_select %p69, %s70, %s71
      %p75 = pneg %p69
      %p76 = scmp.eq.s32.totalorder %s18, 1
      %p77 = por %p75, %p76
      %p78 = scmp.ne.s32.totalorder %s70, %s73
      %p79 = scmp.eq.s32.totalorder %s18, 0
      %p80 = por %p78, %p79
      %p81 = scmp.ne.s32.totalorder %s70, %s73
      %p82 = scmp.eq.s32.totalorder %s23, 1
      %p83 = por %p81, %p82
      %p84 = scmp.ne.s32.totalorder %s73, %s74
      %p85 = scmp.eq.s32.totalorder %s23, 0
      %p86 = por %p84, %p85
      %p87 = scmp.ne.s32.totalorder %s73, %s74
      %p88 = scmp.eq.s32.totalorder %s24, 1
      %p89 = por %p87, %p88
      %p91 = scmp.ne.s32.totalorder %s74, %s90
      %p92 = scmp.eq.s32.totalorder %s24, 0
      %p93 = por %p91, %p92
      %s95 = sadd.s32 %s94, 1
      %p98 = scmp.eq.s32.totalorder %s18, 1
      %p99 = scmp.ne.s32.totalorder %s94, %s96
      %p100 = scmp.eq.s32.totalorder %s18, 0
      %p101 = por %p99, %p100
      %p102 = scmp.ne.s32.totalorder %s94, %s96
      %p103 = scmp.eq.s32.totalorder %s23, 1
      %p104 = por %p102, %p103
      %p105 = scmp.ne.s32.totalorder %s96, %s97
      %p106 = scmp.eq.s32.totalorder %s23, 0
      %p107 = por %p105, %p106
      %p108 = scmp.ne.s32.totalorder %s96, %s97
      %p109 = scmp.eq.s32.totalorder %s24, 1
      %p110 = por %p108, %p109
      %p112 = scmp.ne.s32.totalorder %s97, %s111
      %p113 = scmp.eq.s32.totalorder %s24, 0
      %p114 = por %p112, %p113
      %s115 = ssub.s32 %s25, %s37
      %p116 = scmp.eq.s32.totalorder %s115, 0
      %s118 = sadd.s32 %s117, 1
      %s119 = scalar_select %p116, %s117, %s118
      %p122 = pneg %p116
      %p123 = scmp.eq.s32.totalorder %s18, 1
      %p124 = por %p122, %p123
      %p125 = scmp.ne.s32.totalorder %s117, %s120
      %p126 = scmp.eq.s32.totalorder %s18, 0
      %p127 = por %p125, %p126
      %p128 = scmp.ne.s32.totalorder %s117, %s120
      %p129 = scmp.eq.s32.totalorder %s23, 1
      %p130 = por %p128, %p129
      %p131 = scmp.ne.s32.totalorder %s120, %s121
      %p132 = scmp.eq.s32.totalorder %s23, 0
      %p133 = por %p131, %p132
      %p134 = scmp.ne.s32.totalorder %s120, %s121
      %p135 = scmp.eq.s32.totalorder %s24, 1
      %p136 = por %p134, %p135
      %p138 = scmp.ne.s32.totalorder %s121, %s137
      %p139 = scmp.eq.s32.totalorder %s24, 0
      %p140 = por %p138, %p139
      %p141 = scmp.le.s32.totalorder 1, %s18
      %p142 = scmp.lt.s32.totalorder %s18, 3
      %p143 = pnand %p141, %p142
      %p144 = pneg %p143
      // Predicated region
      $region9: #{tpu_custom_call.1} parent=5 // pred_check
        _
      $region10: #{tpu_custom_call.1} parent=5 // pred_check_branch
        %146 = sbr.rel (%p143) target = $region12
      $region11: #{tpu_custom_call.1} parent=5 // pred_region
        %s147 = ssub.s32 %s18, 1
        // Predicated region
        $region13: #{tpu_custom_call.1} parent=11 // pred_check
          %p148 = pneg %p107
        $region14: #{tpu_custom_call.1} parent=11 // pred_check_branch
          %150 = sbr.rel (%p148) target = $region16
        $region15: #{tpu_custom_call.1} parent=11 // pred_region
          %s152 = ssub.s32 1536, 1536
          %153 = vsyncadd [#allocation7], %s152
          %s154 = sshll.u32 [#allocation8], 4
          %s155 = int_to_ptr.vmem [resolvable:$true] %s154
          %160 = dma.hbm_to_vmem [thread:$0]  %s2, 1536, %s155, [#allocation7], 128, 128, 8
        $region16: #{tpu_custom_call.1} parent=11 // pred_fallthru
          _
      $region12: #{tpu_custom_call.1} parent=5 // pred_fallthru
        _
      %p161 = scmp.lt.s32.totalorder %s18, 2
      // Predicated region
      $region17: #{tpu_custom_call.1} parent=5 // pred_check
        %p162 = pneg %p161
      $region18: #{tpu_custom_call.1} parent=5 // pred_check_branch
        %164 = sbr.rel (%p162) target = $region20
      $region19: #{tpu_custom_call.1} parent=5 // pred_region
        // Predicated region
        $region21: #{tpu_custom_call.1} parent=19 // pred_check
          %p165 = pneg %p52
        $region22: #{tpu_custom_call.1} parent=19 // pred_check_branch
          %167 = sbr.rel (%p165) target = $region24
        $region23: #{tpu_custom_call.1} parent=19 // pred_region
          %s168 = sand.u32 %s42, 1
          %s169 = scalar_lea.sflag [#allocation4], %s168
          %s170 = sand.u32 %s42, 1
          %s171 = smul.addr %s170, 4
          %s172 = scalar_lea.vmem [#allocation3], %s171
          %s173 = sadd.s32 %s25, %s26
          %s175 = ssub.s32 64, 64
          %176 = vsyncadd %s169, %s175
          %s177 = smul.addr %s173, 64
          %s178 = scalar_lea.hbm %s0, %s177
          %s180 = sshll.u32 %s172, 4
          %s181 = int_to_ptr.vmem [resolvable:$true] %s180
          %183 = dma.hbm_to_vmem [thread:$0]  %s178, 64, %s181, %s169
        $region24: #{tpu_custom_call.1} parent=19 // pred_fallthru
          _
        // Predicated region
        $region25: #{tpu_custom_call.1} parent=19 // pred_check
          %p184 = pneg %p80
        $region26: #{tpu_custom_call.1} parent=19 // pred_check_branch
          %186 = sbr.rel (%p184) target = $region28
        $region27: #{tpu_custom_call.1} parent=19 // pred_region
          %s187 = sand.u32 %s18, 1
          %s188 = scalar_lea.sflag [#allocation7], %s187
          %s189 = sand.u32 %s70, 1
          %s190 = scalar_lea.vmem [#allocation6], %s189
          %s191 = sadd.s32 %s25, %s26
          %s193 = ssub.s32 16, 16
          %194 = vsyncadd %s188, %s193
          %s195 = smul.addr %s191, 16
          %s196 = scalar_lea.hbm %s1, %s195
          %s198 = sshll.u32 %s190, 4
          %s199 = int_to_ptr.vmem [resolvable:$true] %s198
          %201 = dma.hbm_to_vmem [thread:$0]  %s196, 16, %s199, %s188
        $region28: #{tpu_custom_call.1} parent=19 // pred_fallthru
          _
      $region20: #{tpu_custom_call.1} parent=5 // pred_fallthru
        _
      %p202 = scmp.le.s32.totalorder 1, %s18
      %p203 = scmp.lt.s32.totalorder %s18, 3
      %p204 = pnand %p202, %p203
      %p205 = pneg %p204
      // Predicated region
      $region29: #{tpu_custom_call.1} parent=5 // pred_check
        _
      $region30: #{tpu_custom_call.1} parent=5 // pred_check_branch
        %207 = sbr.rel (%p204) target = $region32
      $region31: #{tpu_custom_call.1} parent=5 // pred_region
        %s208 = ssub.s32 %s18, 1
        %s209 = sand.u32 %s45, 1
        %s210 = scalar_lea.sflag [#allocation4], %s209
        %s211 = sand.u32 %s45, 1
        %s212 = smul.addr %s211, 4
        %s213 = scalar_lea.vmem [#allocation3], %s212
        // Predicated region
        $region33: #{tpu_custom_call.1} parent=31 // pred_check
          %p214 = pneg %p58
        $region34: #{tpu_custom_call.1} parent=31 // pred_check_branch
          %216 = sbr.rel (%p214) target = $region36
        $region35: #{tpu_custom_call.1} parent=31 // pred_region
          %217 = dma.done %s210, 64
        $region36: #{tpu_custom_call.1} parent=31 // pred_fallthru
          _
        %s218 = sand.u32 %s23, 1
        %s219 = scalar_lea.sflag [#allocation7], %s218
        %s220 = sand.u32 %s73, 1
        %s221 = scalar_lea.vmem [#allocation6], %s220
        // Predicated region
        $region37: #{tpu_custom_call.1} parent=31 // pred_check
          %p222 = pneg %p86
        $region38: #{tpu_custom_call.1} parent=31 // pred_check_branch
          %224 = sbr.rel (%p222) target = $region40
        $region39: #{tpu_custom_call.1} parent=31 // pred_region
          %225 = dma.done %s219, 16
        $region40: #{tpu_custom_call.1} parent=31 // pred_fallthru
          _
        // Predicated region
        $region41: #{tpu_custom_call.1} parent=31 // pred_check
          %p226 = pneg %p107
        $region42: #{tpu_custom_call.1} parent=31 // pred_check_branch
          %228 = sbr.rel (%p226) target = $region44
        $region43: #{tpu_custom_call.1} parent=31 // pred_region
          %229 = dma.done [#allocation7], 1536
        $region44: #{tpu_custom_call.1} parent=31 // pred_fallthru
          _
        %s230 = sand.u32 %s45, 1
        %s231 = scalar_lea.sflag [#allocation4], %s230
        %s232 = sand.u32 %s45, 1
        %s233 = smul.addr %s232, 4
        %s234 = scalar_lea.vmem [#allocation3], %s233
        %p235 = pneg %p58
        %p236 = pneg %p55
        %s237 = sand.u32 %s23, 1
        %s238 = scalar_lea.sflag [#allocation7], %s237
        %s239 = sand.u32 %s73, 1
        %s240 = scalar_lea.vmem [#allocation6], %s239
        %p241 = pneg %p86
        %p242 = pneg %p83
        %p243 = pneg %p107
        %p244 = pneg %p104
        %p245 = pneg %p133
        %p246 = pneg %p130
        %s247 = sand.u32 %s120, 1
        %s248 = scalar_lea.sflag [#allocation5], %s247
        %s249 = sand.u32 %s120, 1
        %s250 = smul.addr %s249, 8
        %s251 = scalar_lea.vmem [#allocation9], %s250
        %s252 = sadd.s32 %s27, %s28
        %s253 = sadd.s32 %s27, %s28
        %p254 = scmp.eq.s32.totalorder %s28, 0
        // Predicated region
        $region45: #{tpu_custom_call.1} parent=31 // pred_check
          %p255 = pneg %p254
        $region46: #{tpu_custom_call.1} parent=31 // pred_check_branch
          %257 = sbr.rel (%p255) target = $region48
        $region47: #{tpu_custom_call.1} parent=31 // pred_region
          %258 = vst [vmem:[#allocation2] sm:$0x1] 0.0
        $region48: #{tpu_custom_call.1} parent=31 // pred_fallthru
          _
        %v259 = vld [vmem:[%s213] sm:$0x1]
        %v260 = vld [vmem:[%s213 + $0x1] sm:$0x1]
        %v261 = vadd.s32 %v260, 12
        %v262 = vld [vmem:[%s213 + $0x2] sm:$0x1]
        %v263 = vadd.s32 %v262, 18
        %v264 = vlaneseq
        %v265 = vshrl.u32 %v264, 7
        %v266 = vadd.s32 %v265, 8
        %v267 = vadd.s32 %v265, 16
        %v268 = vadd.s32 %v265, 24
        %v269 = vadd.s32 %v265, 32
        %v270 = vadd.s32 %v265, 40
        %v271 = vadd.s32 %v265, 48
        %v272 = vadd.s32 %v265, 56
        %v273 = vadd.s32 %v265, 64
        %v274 = vadd.s32 %v265, 72
        %v275 = vadd.s32 %v265, 80
        %v276 = vadd.s32 %v265, 88
        %v277 = vadd.s32 %v265, 96
        %v278 = vadd.s32 %v265, 104
        %v279 = vadd.s32 %v265, 112
        %v280 = vadd.s32 %v265, 120
        %v281 = vlaneseq
        %v282 = vshrl.u32 %v281, 7
        %v283 = vsub.s32 0, %v282
        %v284 = vrot.slane %v259, %v283
        %vm285 = vcmp.eq.s32.totalorder %v265, %v284
        %vm286 = vcmp.eq.s32.totalorder %v266, %v284
        %vm287 = vcmp.eq.s32.totalorder %v267, %v284
        %vm288 = vcmp.eq.s32.totalorder %v268, %v284
        %vm289 = vcmp.eq.s32.totalorder %v269, %v284
        %vm290 = vcmp.eq.s32.totalorder %v270, %v284
        %vm291 = vcmp.eq.s32.totalorder %v271, %v284
        %vm292 = vcmp.eq.s32.totalorder %v272, %v284
        %vm293 = vcmp.eq.s32.totalorder %v273, %v284
        %vm294 = vcmp.eq.s32.totalorder %v274, %v284
        %vm295 = vcmp.eq.s32.totalorder %v275, %v284
        %vm296 = vcmp.eq.s32.totalorder %v276, %v284
        %vm297 = vcmp.eq.s32.totalorder %v277, %v284
        %vm298 = vcmp.eq.s32.totalorder %v278, %v284
        %vm299 = vcmp.eq.s32.totalorder %v279, %v284
        %vm300 = vcmp.eq.s32.totalorder %v280, %v284
        %v301 = vlaneseq
        %v302 = vshrl.u32 %v301, 7
        %v303 = vsub.s32 0, %v302
        %v304 = vrot.slane %v261, %v303
        %vm305 = vcmp.eq.s32.totalorder %v265, %v304
        %vm306 = vcmp.eq.s32.totalorder %v266, %v304
        %vm307 = vcmp.eq.s32.totalorder %v267, %v304
        %vm308 = vcmp.eq.s32.totalorder %v268, %v304
        %vm309 = vcmp.eq.s32.totalorder %v269, %v304
        %vm310 = vcmp.eq.s32.totalorder %v270, %v304
        %vm311 = vcmp.eq.s32.totalorder %v271, %v304
        %vm312 = vcmp.eq.s32.totalorder %v272, %v304
        %vm313 = vcmp.eq.s32.totalorder %v273, %v304
        %vm314 = vcmp.eq.s32.totalorder %v274, %v304
        %vm315 = vcmp.eq.s32.totalorder %v275, %v304
        %vm316 = vcmp.eq.s32.totalorder %v276, %v304
        %vm317 = vcmp.eq.s32.totalorder %v277, %v304
        %vm318 = vcmp.eq.s32.totalorder %v278, %v304
        %vm319 = vcmp.eq.s32.totalorder %v279, %v304
        %vm320 = vcmp.eq.s32.totalorder %v280, %v304
        %vm321 = vmor %vm285, %vm305
        %vm322 = vmor %vm286, %vm306
        %vm323 = vmor %vm287, %vm307
        %vm324 = vmor %vm288, %vm308
        %vm325 = vmor %vm289, %vm309
        %vm326 = vmor %vm290, %vm310
        %vm327 = vmor %vm291, %vm311
        %vm328 = vmor %vm292, %vm312
        %vm329 = vmor %vm293, %vm313
        %vm330 = vmor %vm294, %vm314
        %vm331 = vmor %vm295, %vm315
        %vm332 = vmor %vm296, %vm316
        %vm333 = vmor %vm297, %vm317
        %vm334 = vmor %vm298, %vm318
        %vm335 = vmor %vm299, %vm319
        %vm336 = vmor %vm300, %vm320
        %v337 = vlaneseq
        %v338 = vshrl.u32 %v337, 7
        %v339 = vsub.s32 0, %v338
        %v340 = vrot.slane %v263, %v339
        %vm341 = vcmp.eq.s32.totalorder %v265, %v340
        %vm342 = vcmp.eq.s32.totalorder %v266, %v340
        %vm343 = vcmp.eq.s32.totalorder %v267, %v340
        %vm344 = vcmp.eq.s32.totalorder %v268, %v340
        %vm345 = vcmp.eq.s32.totalorder %v269, %v340
        %vm346 = vcmp.eq.s32.totalorder %v270, %v340
        %vm347 = vcmp.eq.s32.totalorder %v271, %v340
        %vm348 = vcmp.eq.s32.totalorder %v272, %v340
        %vm349 = vcmp.eq.s32.totalorder %v273, %v340
        %vm350 = vcmp.eq.s32.totalorder %v274, %v340
        %vm351 = vcmp.eq.s32.totalorder %v275, %v340
        %vm352 = vcmp.eq.s32.totalorder %v276, %v340
        %vm353 = vcmp.eq.s32.totalorder %v277, %v340
        %vm354 = vcmp.eq.s32.totalorder %v278, %v340
        %vm355 = vcmp.eq.s32.totalorder %v279, %v340
        %vm356 = vcmp.eq.s32.totalorder %v280, %v340
        %vm357 = vmor %vm321, %vm341
        %vm358 = vmor %vm322, %vm342
        %vm359 = vmor %vm323, %vm343
        %vm360 = vmor %vm324, %vm344
        %vm361 = vmor %vm325, %vm345
        %vm362 = vmor %vm326, %vm346
        %vm363 = vmor %vm327, %vm347
        %vm364 = vmor %vm328, %vm348
        %vm365 = vmor %vm329, %vm349
        %vm366 = vmor %vm330, %vm350
        %vm367 = vmor %vm331, %vm351
        %vm368 = vmor %vm332, %vm352
        %vm369 = vmor %vm333, %vm353
        %vm370 = vmor %vm334, %vm354
        %vm371 = vmor %vm335, %vm355
        %vm372 = vmor %vm336, %vm356
        %v373 = vsel %vm357, 1, 0
        %v374 = vsel %vm358, 1, 0
        %v375 = vsel %vm359, 1, 0
        %v376 = vsel %vm360, 1, 0
        %v377 = vsel %vm361, 1, 0
        %v378 = vsel %vm362, 1, 0
        %v379 = vsel %vm363, 1, 0
        %v380 = vsel %vm364, 1, 0
        %v381 = vsel %vm365, 1, 0
        %v382 = vsel %vm366, 1, 0
        %v383 = vsel %vm367, 1, 0
        %v384 = vsel %vm368, 1, 0
        %v385 = vsel %vm369, 1, 0
        %v386 = vsel %vm370, 1, 0
        %v387 = vsel %vm371, 1, 0
        %v388 = vsel %vm372, 1, 0
        %v389 = vcvt.s32.f32 %v373
        %v390 = vcvt.s32.f32 %v374
        %v391 = vcvt.s32.f32 %v375
        %v392 = vcvt.s32.f32 %v376
        %v393 = vcvt.s32.f32 %v377
        %v394 = vcvt.s32.f32 %v378
        %v395 = vcvt.s32.f32 %v379
        %v396 = vcvt.s32.f32 %v380
        %v397 = vcvt.s32.f32 %v381
        %v398 = vcvt.s32.f32 %v382
        %v399 = vcvt.s32.f32 %v383
        %v400 = vcvt.s32.f32 %v384
        %v401 = vcvt.s32.f32 %v385
        %v402 = vcvt.s32.f32 %v386
        %v403 = vcvt.s32.f32 %v387
        %v404 = vcvt.s32.f32 %v388
        %v405 = vld [vmem:[#allocation8] sm:$0xff]
        %v406 = vld [vmem:[#allocation8 + $0x8] sm:$0xff]
        %v407 = vld [vmem:[#allocation8 + $0x10] sm:$0xff]
        %v408 = vld [vmem:[#allocation8 + $0x18] sm:$0xff]
        %v409 = vld [vmem:[#allocation8 + $0x20] sm:$0xff]
        %v410 = vld [vmem:[#allocation8 + $0x28] sm:$0xff]
        %v411 = vld [vmem:[#allocation8 + $0x30] sm:$0xff]
        %v412 = vld [vmem:[#allocation8 + $0x38] sm:$0xff]
        %v413 = vld [vmem:[#allocation8 + $0x40] sm:$0xff]
        %v414 = vld [vmem:[#allocation8 + $0x48] sm:$0xff]
        %v415 = vld [vmem:[#allocation8 + $0x50] sm:$0xff]
        %v416 = vld [vmem:[#allocation8 + $0x58] sm:$0xff]
        %417 = vmatprep.subr.mxu0 0.0
        %418 = vmatpush1.msra.mxu0 %v404
        %419 = vmatprep.subr.mxu0 0.0
        %420 = vmatpush1.msra.mxu0 %v403
        %421 = vmatprep.subr.mxu0 0.0
        %422 = vmatpush1.msra.mxu0 %v402
        %423 = vmatprep.subr.mxu0 0.0
        %424 = vmatpush1.msra.mxu0 %v401
        %425 = vmatprep.subr.mxu0 0.0
        %426 = vmatpush1.msra.mxu0 %v400
        %427 = vmatprep.subr.mxu0 0.0
        %428 = vmatpush1.msra.mxu0 %v399
        %429 = vmatprep.subr.mxu0 0.0
        %430 = vmatpush1.msra.mxu0 %v398
        %431 = vmatprep.subr.mxu0 0.0
        %432 = vmatpush1.msra.mxu0 %v397
        %433 = vmatprep.subr.mxu0 0.0
        %434 = vmatpush1.msra.mxu0 %v396
        %435 = vmatprep.subr.mxu0 0.0
        %436 = vmatpush1.msra.mxu0 %v395
        %437 = vmatprep.subr.mxu0 0.0
        %438 = vmatpush1.msra.mxu0 %v394
        %439 = vmatprep.subr.mxu0 0.0
        %440 = vmatpush1.msra.mxu0 %v393
        %441 = vmatprep.subr.mxu0 0.0
        %442 = vmatpush1.msra.mxu0 %v392
        %443 = vmatprep.subr.mxu0 0.0
        %444 = vmatpush1.msra.mxu0 %v391
        %445 = vmatprep.subr.mxu0 0.0
        %446 = vmatpush1.msra.mxu0 %v390
        %447 = vmatprep.subr.mxu0 0.0
        %448 = vmatpush1.msra.mxu0 %v389
        %449 = vmatprep.subr.mxu0 0.0
        %450 = vmatpush2.msra.mxu0 0.0
        %451 = vmatprep.subr.mxu0 0.0
        %452 = vmatpush2.msra.mxu0 0.0
        %453 = vmatprep.subr.mxu0 0.0
        %454 = vmatpush2.msra.mxu0 0.0
        %455 = vmatprep.subr.mxu0 0.0
        %456 = vmatpush2.msra.mxu0 0.0
        %457 = vmatprep.subr.mxu0 0.0
        %458 = vmatpush2.msra.mxu0 0.0
        %459 = vmatprep.subr.mxu0 0.0
        %460 = vmatpush2.msra.mxu0 0.0
        %461 = vmatprep.subr.mxu0 0.0
        %462 = vmatpush2.msra.mxu0 0.0
        %463 = vmatprep.subr.mxu0 0.0
        %464 = vmatpush2.msra.mxu0 0.0
        %465 = vmatprep.subr.mxu0 0.0
        %466 = vmatpush2.msra.mxu0 0.0
        %467 = vmatprep.subr.mxu0 0.0
        %468 = vmatpush2.msra.mxu0 0.0
        %469 = vmatprep.subr.mxu0 0.0
        %470 = vmatpush2.msra.mxu0 0.0
        %471 = vmatprep.subr.mxu0 0.0
        %472 = vmatpush2.msra.mxu0 0.0
        %473 = vmatprep.subr.mxu0 0.0
        %474 = vmatpush2.msra.mxu0 0.0
        %475 = vmatprep.subr.mxu0 0.0
        %476 = vmatpush2.msra.mxu0 0.0
        %477 = vmatprep.subr.mxu0 0.0
        %478 = vmatpush2.msra.mxu0 0.0
        %479 = vmatprep.subr.mxu0 0.0
        %480 = vmatpush2.msra.mxu0 0.0
        %481 = vmatprep.mubr.f32.mxu0 0.0
        %482 = vmatmul.mubr.f32.gmra.mxu0 %v405
        %v483 = vpop.f32.mrf.mxu0
        %v484 = vadd.f32 0.0, %v483
        %v485 = vpop.f32.mrf.mxu0
        %486 = vmatprep.mubr.f32.mxu0 0.0
        %487 = vmatmul.mubr.f32.gmra.mxu0 %v406
        %v488 = vpop.f32.mrf.mxu0
        %v489 = vadd.f32 0.0, %v488
        %v490 = vpop.f32.mrf.mxu0
        %491 = vmatprep.mubr.f32.mxu0 0.0
        %492 = vmatmul.mubr.f32.gmra.mxu0 %v407
        %v493 = vpop.f32.mrf.mxu0
        %v494 = vadd.f32 0.0, %v493
        %v495 = vpop.f32.mrf.mxu0
        %496 = vmatprep.mubr.f32.mxu0 0.0
        %497 = vmatmul.mubr.f32.gmra.mxu0 %v408
        %v498 = vpop.f32.mrf.mxu0
        %v499 = vadd.f32 0.0, %v498
        %v500 = vpop.f32.mrf.mxu0
        %501 = vmatprep.mubr.f32.mxu0 0.0
        %502 = vmatmul.mubr.f32.gmra.mxu0 %v409
        %v503 = vpop.f32.mrf.mxu0
        %v504 = vadd.f32 0.0, %v503
        %v505 = vpop.f32.mrf.mxu0
        %506 = vmatprep.mubr.f32.mxu0 0.0
        %507 = vmatmul.mubr.f32.gmra.mxu0 %v410
        %v508 = vpop.f32.mrf.mxu0
        %v509 = vadd.f32 0.0, %v508
        %v510 = vpop.f32.mrf.mxu0
        %511 = vmatprep.mubr.f32.mxu0 0.0
        %512 = vmatmul.mubr.f32.gmra.mxu0 %v411
        %v513 = vpop.f32.mrf.mxu0
        %v514 = vadd.f32 0.0, %v513
        %v515 = vpop.f32.mrf.mxu0
        %516 = vmatprep.mubr.f32.mxu0 0.0
        %517 = vmatmul.mubr.f32.gmra.mxu0 %v412
        %v518 = vpop.f32.mrf.mxu0
        %v519 = vadd.f32 0.0, %v518
        %v520 = vpop.f32.mrf.mxu0
        %521 = vmatprep.mubr.f32.mxu0 0.0
        %522 = vmatmul.mubr.f32.gmra.mxu0 %v413
        %v523 = vpop.f32.mrf.mxu0
        %v524 = vadd.f32 0.0, %v523
        %v525 = vpop.f32.mrf.mxu0
        %526 = vmatprep.mubr.f32.mxu0 0.0
        %527 = vmatmul.mubr.f32.gmra.mxu0 %v414
        %v528 = vpop.f32.mrf.mxu0
        %v529 = vadd.f32 0.0, %v528
        %v530 = vpop.f32.mrf.mxu0
        %531 = vmatprep.mubr.f32.mxu0 0.0
        %532 = vmatmul.mubr.f32.gmra.mxu0 %v415
        %v533 = vpop.f32.mrf.mxu0
        %v534 = vadd.f32 0.0, %v533
        %v535 = vpop.f32.mrf.mxu0
        %536 = vmatprep.mubr.f32.mxu0 0.0
        %537 = vmatmul.mubr.f32.gmra.mxu0 %v416
        %v538 = vpop.f32.mrf.mxu0
        %v539 = vadd.f32 0.0, %v538
        %v540 = vpop.f32.mrf.mxu0
        %541 = vdwg.mxu0
        %v542 = vmul.f32 %v484, %v504
        %v543 = vmul.f32 %v489, %v509
        %v544 = vmul.f32 %v494, %v514
        %v545 = vmul.f32 %v499, %v519
        %v546 = vmul.f32 %v542, %v524
        %v547 = vmul.f32 %v543, %v529
        %v548 = vmul.f32 %v544, %v534
        %v549 = vmul.f32 %v545, %v539
        %v550 = vadd.f32 %v546, %v547
        %v551 = vadd.f32 %v550, %v548
        %v552 = vadd.f32 %v551, %v549
        %v553 = vrot.slane %v552, 4
        %v554 = vadd.f32 %v552, %v553
        %v555 = vrot.slane %v554, 2
        %v556 = vadd.f32 %v554, %v555
        %v557 = vrot.slane %v556, 1
        %v558 = vadd.f32 %v556, %v557
        %v559 = vsub.f32 0.0, %v558
        %v560 = vld [vmem:[%s221] sm:$0x1]
        %v561 = vmul.f32 %v559, %v560
        %v562 = vmax.f32 %v561, 0.0
        %v563 = vand.u32 2147483647, %v561
        %v564 = vsub.f32 0.0, %v563
        %v565 = vmul.f32 %v564, 1.442695
        %v566 = vpow.pop %v565
        %v567 = vadd.f32 %v566, 1.0
        %v568 = vlog2.pop %v567
        %v569 = vmul.f32 %v568, 0.6931472
        %v570 = vmul.f32 -0.5, %v566
        %v571 = vadd.f32 %v570, 1.0
        %v572 = vmul.f32 %v571, %v566
        %v573 = vand.u32 2147483647, %v566
        %vm574 = vcmp.lt.f32.partialorder %v573, 0.0004427343
        %v575 = vsel %vm574, %v572, %v569
        %v576 = vadd.f32 %v562, %v575
        %v577 = vmul.f32 %v484, %v484
        %v578 = vmul.f32 %v489, %v489
        %v579 = vmul.f32 %v494, %v494
        %v580 = vmul.f32 %v499, %v499
        %v581 = vmul.f32 %v504, %v504
        %v582 = vmul.f32 %v509, %v509
        %v583 = vmul.f32 %v514, %v514
        %v584 = vmul.f32 %v519, %v519
        %v585 = vmul.f32 %v524, %v524
        %v586 = vmul.f32 %v529, %v529
        %v587 = vmul.f32 %v534, %v534
        %v588 = vmul.f32 %v539, %v539
        %v589 = vadd.f32 %v577, %v578
        %v590 = vadd.f32 %v589, %v579
        %v591 = vadd.f32 %v590, %v580
        %v592 = vadd.f32 %v591, %v581
        %v593 = vadd.f32 %v592, %v582
        %v594 = vadd.f32 %v593, %v583
        %v595 = vadd.f32 %v594, %v584
        %v596 = vadd.f32 %v595, %v585
        %v597 = vadd.f32 %v596, %v586
        %v598 = vadd.f32 %v597, %v587
        %v599 = vadd.f32 %v598, %v588
        %v600 = vrot.slane %v599, 4
        %v601 = vadd.f32 %v599, %v600
        %v602 = vrot.slane %v601, 2
        %v603 = vadd.f32 %v601, %v602
        %v604 = vrot.slane %v603, 1
        %v605 = vadd.f32 %v603, %v604
        %s606 = sadd.s32 %s27, %s28
        %s607 = smul.u32 %s606, 128
        %v608 = vlaneseq
        %v609 = vand.u32 %v608, 127
        %v610 = vstv %s607
        %v611 = vadd.s32 %v610, %v609
        %vm612 = vcmp.lt.s32.totalorder %v611, 8
        %v613 = vmul.f32 %v576, 0.125
        %v614 = vmul.f32 %v605, 3.90625e-05
        %v615 = vadd.f32 %v613, %v614
        %v616 = vsel %vm612, %v615, 0.0
        %v617 = vld [vmem:[#allocation2] sm:$0x1]
        %v618 = vadd.f32 %v617, %v616
        %619 = vst [vmem:[#allocation2] sm:$0x1] %v618
        // Predicated region
        $region49: #{tpu_custom_call.1} parent=31 // pred_check
          %p620 = pneg %p254
        $region50: #{tpu_custom_call.1} parent=31 // pred_check_branch
          %622 = sbr.rel (%p620) target = $region52
        $region51: #{tpu_custom_call.1} parent=31 // pred_region
          %v623 = vld [vmem:[#allocation2] sm:$0x1]
          %vm624 = vcmask 1040384
          %v625 = vsel %vm624, %v623, 0.0
          %626 = vadd.xlane.f32.xlu0 %v625
          %v627 = vpop.xlane.xlu0 %626
          %v628 = vrot.slane %v627, 4
          %v629 = vadd.f32 %v627, %v628
          %v630 = vrot.slane %v629, 2
          %v631 = vadd.f32 %v629, %v630
          %v632 = vrot.slane %v631, 1
          %v633 = vadd.f32 %v631, %v632
          %s634 = vtos %v633
          %v635 = vstv %s634
          %v636 = vadd.f32 %v635, 0.0
          %637 = vst [vmem:[%s251] sm:$0xff] %v636
        $region52: #{tpu_custom_call.1} parent=31 // pred_fallthru
          _
        %s638 = sand.u32 %s120, 1
        %s639 = scalar_lea.sflag [#allocation5], %s638
        %s640 = sand.u32 %s120, 1
        %s641 = smul.addr %s640, 8
        %s642 = scalar_lea.vmem [#allocation9], %s641
        // Predicated region
        $region53: #{tpu_custom_call.1} parent=31 // pred_check
          %p643 = pneg %p130
        $region54: #{tpu_custom_call.1} parent=31 // pred_check_branch
          %645 = sbr.rel (%p643) target = $region56
        $region55: #{tpu_custom_call.1} parent=31 // pred_region
          %s647 = ssub.s32 128, 128
          %648 = vsyncadd %s639, %s647
          %s649 = smul.addr %s27, 128
          %s650 = scalar_lea.hbm %s3, %s649
          %s652 = sshll.u32 %s642, 4
          %s653 = int_to_ptr.vmem [resolvable:$true] %s652
          %655 = dma.vmem_to_hbm [thread:$0]  %s653, 128, %s650, %s639
        $region56: #{tpu_custom_call.1} parent=31 // pred_fallthru
          _
      $region32: #{tpu_custom_call.1} parent=5 // pred_fallthru
        _
      %p656 = scmp.le.s32.totalorder 2, %s18
      // Predicated region
      $region57: #{tpu_custom_call.1} parent=5 // pred_check
        %p657 = pneg %p656
      $region58: #{tpu_custom_call.1} parent=5 // pred_check_branch
        %659 = sbr.rel (%p657) target = $region60
      $region59: #{tpu_custom_call.1} parent=5 // pred_region
        %s660 = ssub.s32 %s18, 2
        // Predicated region
        $region61: #{tpu_custom_call.1} parent=59 // pred_check
          %p661 = pneg %p136
        $region62: #{tpu_custom_call.1} parent=59 // pred_check_branch
          %663 = sbr.rel (%p661) target = $region64
        $region63: #{tpu_custom_call.1} parent=59 // pred_region
          %s664 = sand.u32 %s121, 1
          %s665 = scalar_lea.sflag [#allocation5], %s664
          %s666 = sand.u32 %s121, 1
          %s667 = smul.addr %s666, 8
          %s668 = scalar_lea.vmem [#allocation9], %s667
          %669 = dma.done %s665, 128
        $region64: #{tpu_custom_call.1} parent=59 // pred_fallthru
          _
      $region60: #{tpu_custom_call.1} parent=5 // pred_fallthru
        _
    $region6: #{tpu_custom_call.1} parent=1 // loop_footer
      %s22 = sadd.s32 1, %s18
    $region7: #{tpu_custom_call.1} parent=1 // loop_footer_branch
      %17 = sbr.rel target = $region3
    $region8: #{tpu_custom_call.1} parent=1 // loop_exit
      _
    %670 = vsyncpa [#allocation4], 1
    %s671 = scalar_lea.sflag [#allocation4], 1
    %672 = vsyncpa %s671, 1
    %673 = vsyncpa [#allocation7], 1
    %s674 = scalar_lea.sflag [#allocation7], 1
    %675 = vsyncpa %s674, 1
    %676 = vsyncpa [#allocation5], 1
    %s677 = scalar_lea.sflag [#allocation5], 1
    %678 = vsyncpa %s677, 1

</llo_original>
